<compile_context>
chip_gen: v7x
topology: tpu7x:2x2x1
jax: 0.10.0
libtpu: 0.0.40
codegen_flags: <defaults>
</compile_context>

<pallas_src>
import jax
import jax.numpy as jnp
from jax import lax
from jax.experimental import pallas as pl
from jax.experimental.pallas import tpu as pltpu


def _self_attn_kernel(lens_ref, outp_ref, w1t_ref, w2_ref, m_ref, alphas_ref):
    """One grid step processes a whole batch tile with block-level (fused) ops.

    lens_ref  : VMEM (bt, 1)     int32
    outp_ref  : VMEM (bt, L, D)  f32
    w1t_ref   : VMEM (D, U)      f32   (W1 pre-transposed in the wrapper)
    w2_ref    : VMEM (H, U)      f32
    m_ref     : VMEM (bt*H, D)   f32   (leading dims collapsed -> dense stores)
    alphas_ref: VMEM (bt*H, L)   f32
    """
    bt, L, D = outp_ref.shape
    H, U = w2_ref.shape

    x = outp_ref[...]                                    # (bt, L, D)
    w1t = w1t_ref[...]                                   # (D, U)
    w2 = w2_ref[...]                                     # (H, U)
    lens = lens_ref[...]                                 # (bt, 1) int32

    # hbar = tanh(outp @ W1.T): ONE (bt*L, D) x (D, U) matmul for the whole tile
    # (full MXU rows instead of bt tiny 8-row matmuls).
    hbar = jnp.tanh(
        jnp.dot(x.reshape(bt * L, D), w1t, preferred_element_type=jnp.float32)
    ).reshape(bt, L, U)

    # logits laid out (bt, H, L) so the softmax reduction stays on the lane axis.
    logits = jnp.einsum('blu,hu->bhl', hbar, w2,
                        preferred_element_type=jnp.float32)          # (bt, H, L)

    # -10000 penalty on padded positions: one vectorized mask for the whole tile.
    col = lax.broadcasted_iota(jnp.int32, (bt, H, L), 2)
    logits = jnp.where(col >= lens[:, :, None], logits - 10000.0, logits)

    # numerically stable softmax over the sequence (lane) axis; exact division for
    # parity with PyTorch's softmax (the (bt, H, 1) divide is negligible here).
    logits = logits - jnp.max(logits, axis=-1, keepdims=True)
    e = jnp.exp(logits)
    alphas = e / jnp.sum(e, axis=-1, keepdims=True)                  # (bt, H, L)

    # M = alphas @ outp, batched over the tile.
    m = jnp.einsum('bhl,bld->bhd', alphas, x,
                   preferred_element_type=jnp.float32)               # (bt, H, D)

    # single bulk store per output; (bt, H) collapsed for denser stores / output DMA
    alphas_ref[...] = alphas.reshape(bt * H, L)
    m_ref[...] = m.reshape(bt * H, D)


def self_attentive_encoder(outp, w1, w2, lengths=None, penalize=True, block_b=None):
    """outp: (L, D) or (B, L, D); w1: (att_units, mem_dim); w2: (hops, att_units).

    lengths: scalar or (B,) int (number of real tokens per sequence).
    Returns (M, alphas) with shapes (B, hops, mem_dim), (B, hops, L); for a 2-D
    input B == 1, matching the PyTorch module's (1, hops, mem_dim), (1, hops, L).
    """
    if outp.ndim == 2:
        outp = outp[None]
    B, L, D = outp.shape
    H, U = w2.shape

    if not penalize or lengths is None:
        lengths = jnp.full((B,), L, dtype=jnp.int32)     # no penalty applied
    else:
        lengths = jnp.broadcast_to(
            jnp.atleast_1d(jnp.asarray(lengths, jnp.int32)), (B,))

    # --- batch-tile size -----------------------------------------------------
    # Grid steps run sequentially on a TensorCore, so small batches use a single
    # step (bt == B).  Large batches tile so the fused (bt*L, D) matmul presents
    # ~512 rows to the MXU, capped by a per-step VMEM working-set budget.
    if block_b is not None:
        bt = max(1, min(int(block_b), B))
    elif B * L <= 2048:
        bt = B
    else:
        bt = max(8, min(B, (max(512 // L, 8) // 8) * 8))
        per_seq_bytes = 4 * (L * D + L * U + 3 * H * L + 2 * H * D)
        bt = max(8, min(bt, ((4 << 20) // max(per_seq_bytes, 1)) // 8 * 8))
    if bt < B and bt % 8:
        bt = min(B, ((bt + 7) // 8) * 8)     # keep tiled block dims 8-aligned

    b_pad = ((B + bt - 1) // bt) * bt
    if b_pad != B:
        outp = jnp.pad(outp, ((0, b_pad - B), (0, 0), (0, 0)))
        lengths = jnp.pad(lengths, (0, b_pad - B), constant_values=L)

    outp = outp.astype(jnp.float32)
    w1t = w1.astype(jnp.float32).T                       # (D, U): free wrapper layout
    w2 = w2.astype(jnp.float32)
    lens2d = lengths.reshape(b_pad, 1)

    grid = (b_pad // bt,)

    flops = 2 * b_pad * (L * D * U + H * U * L + H * L * D)
    transcendentals = b_pad * (L * U + H * L)            # tanh + exp
    bytes_accessed = 4 * (b_pad * L * D + D * U + H * U + b_pad
                          + b_pad * H * D + b_pad * H * L)

    # Explicit VMEM limit: double-buffered blocks + weights + in-kernel temporaries,
    # with headroom; always within the 32 MiB scoped default that is safe everywhere.
    block_bytes = 4 * (bt * L * D + bt * H * D + bt * H * L + bt)
    weight_bytes = 4 * (D * U + H * U)
    temp_bytes = 4 * (bt * L * U + 3 * bt * H * L)
    vmem_needed = 2 * block_bytes + 2 * weight_bytes + 2 * temp_bytes
    vmem_limit = int(min(32 << 20, max(vmem_needed + (4 << 20), 16 << 20)))

    m2d, a2d = pl.pallas_call(
        _self_attn_kernel,
        out_shape=(jax.ShapeDtypeStruct((b_pad * H, D), jnp.float32),
                   jax.ShapeDtypeStruct((b_pad * H, L), jnp.float32)),
        grid_spec=pltpu.PrefetchScalarGridSpec(
            num_scalar_prefetch=0,
            grid=grid,
            in_specs=[
                pl.BlockSpec((bt, 1), lambda g: (g, 0)),          # lengths
                pl.BlockSpec((bt, L, D), lambda g: (g, 0, 0)),    # outp batch tile
                pl.BlockSpec((D, U), lambda g: (0, 0)),           # W1^T, VMEM-resident
                pl.BlockSpec((H, U), lambda g: (0, 0)),           # W2,   VMEM-resident
            ],
            out_specs=(
                pl.BlockSpec((bt * H, D), lambda g: (g, 0)),
                pl.BlockSpec((bt * H, L), lambda g: (g, 0)),
            ),
        ),
        compiler_params=pltpu.CompilerParams(
            dimension_semantics=("parallel",) if grid[0] > 1 else ("arbitrary",),
            vmem_limit_bytes=vmem_limit),
        cost_estimate=pl.CostEstimate(flops=flops,
                                      transcendentals=transcendentals,
                                      bytes_accessed=bytes_accessed),
    )(lens2d, outp, w1t, w2)

    m = m2d.reshape(b_pad, H, D)[:B]
    alphas = a2d.reshape(b_pad, H, L)[:B]
    return m, alphas


def _reference(outp, w1, w2, lengths):
    B, L, D = outp.shape
    hbar = jnp.tanh(jnp.einsum('bld,ud->blu', outp, w1))
    logits = jnp.einsum('blu,hu->bhl', hbar, w2)
    pen = (jnp.arange(L)[None, None, :] >= lengths[:, None, None]).astype(jnp.float32)
    logits = logits - 10000.0 * pen
    alphas = jax.nn.softmax(logits, axis=-1)
    M = jnp.einsum('bhl,bld->bhd', alphas, outp)
    return M, alphas


if __name__ == "__main__":
    # module config: mem_dim=32, att_units=16, att_hops=4, maxlen (L)=8; batch of 8
    mem_dim, att_units, att_hops, maxlen, batch = 32, 16, 4, 8, 8

    key = jax.random.PRNGKey(0)
    k_out, k_w1, k_w2 = jax.random.split(key, 3)

    outp = jax.random.normal(k_out, (batch, maxlen, mem_dim), dtype=jnp.float32)
    # init_weights(): uniform(-0.1, 0.1), PyTorch (out_features, in_features) layout
    w1 = jax.random.uniform(k_w1, (att_units, mem_dim), jnp.float32, -0.1, 0.1)
    w2 = jax.random.uniform(k_w2, (att_hops, att_units), jnp.float32, -0.1, 0.1)
    lengths = jnp.array([5, 8, 3, 6, 8, 1, 7, 4], dtype=jnp.int32)

    # TODO(synk): nn.Dropout(dropout2) is identity in eval mode; not implemented in-kernel.
    M, alphas = self_attentive_encoder(outp, w1, w2, lengths=lengths, penalize=True)
    M = jax.block_until_ready(M)
    alphas = jax.block_until_ready(alphas)

    M_ref, alphas_ref = _reference(outp, w1, w2, lengths)
    assert M.shape == (batch, att_hops, mem_dim)
    assert alphas.shape == (batch, att_hops, maxlen)
    assert jnp.allclose(M, M_ref, atol=1e-4, rtol=1e-4)
    assert jnp.allclose(alphas, alphas_ref, atol=1e-4, rtol=1e-4)
    assert jnp.allclose(alphas.sum(-1), 1.0, atol=1e-4)

    # single-sequence path matches the original module's (1, hops, ...) contract
    M1, a1 = self_attentive_encoder(outp[0], w1, w2, lengths=int(lengths[0]),
                                    penalize=True)
    M1 = jax.block_until_ready(M1)
    assert M1.shape == (1, att_hops, mem_dim) and a1.shape == (1, att_hops, maxlen)
    assert jnp.allclose(M1[0], M_ref[0], atol=1e-4, rtol=1e-4)

    print("KERNEL_OK")
</pallas_src>

<mosaic_0001>
module attributes {stable_mosaic.version = 11 : i64} {
  func.func @_self_attn_kernel(%arg0: i32, %arg1: memref<8x1xi32, #tpu.memory_space<vmem>>, %arg2: memref<8x8x32xf32, #tpu.memory_space<vmem>>, %arg3: memref<32x16xf32, #tpu.memory_space<vmem>>, %arg4: memref<4x16xf32, #tpu.memory_space<vmem>>, %arg5: memref<32x32xf32, #tpu.memory_space<vmem>>, %arg6: memref<32x8xf32, #tpu.memory_space<vmem>>) attributes {dimension_semantics = [#tpu.dimension_semantics<arbitrary>], iteration_bounds = array<i64: 1>, scalar_prefetch = 0 : i64, scratch_operands = 0 : i64, tpu.core_type = #tpu.core_type<tc>, window_params = [{transform_indices = @transform_0, window_bounds = array<i64: 8, 1>}, {transform_indices = @transform_1, window_bounds = array<i64: 8, 8, 32>}, {pipeline_mode = #tpu.pipeline_mode<synchronous>, transform_indices = @transform_2, window_bounds = array<i64: 32, 16>}, {pipeline_mode = #tpu.pipeline_mode<synchronous>, transform_indices = @transform_3, window_bounds = array<i64: 4, 16>}, {transform_indices = @transform_4, window_bounds = array<i64: 32, 32>}, {transform_indices = @transform_5, window_bounds = array<i64: 32, 8>}]} {
    %c0 = arith.constant 0 : index
    %c0_0 = arith.constant 0 : index
    %c0_1 = arith.constant 0 : index
    %0 = vector.load %arg2[%c0, %c0_0, %c0_1] : memref<8x8x32xf32, #tpu.memory_space<vmem>>, vector<8x8x32xf32>
    %c0_2 = arith.constant 0 : index
    %c0_3 = arith.constant 0 : index
    %1 = vector.load %arg3[%c0_2, %c0_3] : memref<32x16xf32, #tpu.memory_space<vmem>>, vector<32x16xf32>
    %c0_4 = arith.constant 0 : index
    %c0_5 = arith.constant 0 : index
    %2 = vector.load %arg4[%c0_4, %c0_5] : memref<4x16xf32, #tpu.memory_space<vmem>>, vector<4x16xf32>
    %c0_6 = arith.constant 0 : index
    %c0_7 = arith.constant 0 : index
    %3 = vector.load %arg1[%c0_6, %c0_7] : memref<8x1xi32, #tpu.memory_space<vmem>>, vector<8x1xi32>
    %4 = vector.shape_cast %0 : vector<8x8x32xf32> to vector<64x32xf32>
    %cst = arith.constant dense<0.000000e+00> : vector<64x16xf32>
    %5 = tpu.matmul %4, %1, %cst {dimension_numbers = #tpu.dot_dimension_numbers<[1], [0], [0], [1], [0, 0, 1, 1], [], []>} : vector<64x32xf32>, vector<32x16xf32>, vector<64x16xf32> -> vector<64x16xf32>
    %6 = math.tanh %5 : vector<64x16xf32>
    %7 = vector.shape_cast %6 : vector<64x16xf32> to vector<8x8x16xf32>
    "tpu.trace_start"() <{level = 10 : i32, message = "blu,hu->bhl"}> : () -> ()
    %cst_8 = arith.constant dense<0.000000e+00> : vector<4x8x8xf32>
    %8 = tpu.matmul %2, %7, %cst_8 {dimension_numbers = #tpu.dot_dimension_numbers<[1], [2], [0], [0, 1], [0, 0, 1, 0, 1, 1], [], []>} : vector<4x16xf32>, vector<8x8x16xf32>, vector<4x8x8xf32> -> vector<4x8x8xf32>
    %9 = tpu.transpose %8, [1, 0, 2] : vector<4x8x8xf32> -> vector<8x4x8xf32>
    "tpu.trace_stop"() : () -> ()
    %10 = tpu.iota {dimensions = array<i32: 2>} : vector<8x4x8xi32>
    %11 = vector.shape_cast %3 : vector<8x1xi32> to vector<8x1x1xi32>
    %12 = vector.broadcast %11 : vector<8x1x1xi32> to vector<8x4x8xi32>
    %13 = arith.cmpi sge, %10, %12 : vector<8x4x8xi32>
    %cst_9 = arith.constant 1.000000e+04 : f32
    %14 = vector.broadcast %cst_9 : f32 to vector<8x4x8xf32>
    %15 = arith.subf %9, %14 : vector<8x4x8xf32>
    %16 = arith.select %13, %15, %9 : vector<8x4x8xi1>, vector<8x4x8xf32>
    %cst_10 = arith.constant dense<0xFF800000> : vector<8x4xf32>
    %17 = vector.multi_reduction <maximumf>, %16, %cst_10 [2] : vector<8x4x8xf32> to vector<8x4xf32>
    %18 = vector.shape_cast %17 : vector<8x4xf32> to vector<8x4x1xf32>
    %19 = vector.broadcast %18 : vector<8x4x1xf32> to vector<8x4x8xf32>
    %20 = arith.subf %16, %19 : vector<8x4x8xf32>
    %21 = math.exp %20 : vector<8x4x8xf32>
    %cst_11 = arith.constant dense<0.000000e+00> : vector<8x4xf32>
    %22 = vector.multi_reduction <add>, %21, %cst_11 [2] : vector<8x4x8xf32> to vector<8x4xf32>
    %23 = vector.shape_cast %22 : vector<8x4xf32> to vector<8x4x1xf32>
    %24 = vector.broadcast %23 : vector<8x4x1xf32> to vector<8x4x8xf32>
    %25 = arith.divf %21, %24 : vector<8x4x8xf32>
    "tpu.trace_start"() <{level = 10 : i32, message = "bhl,bld->bhd"}> : () -> ()
    %cst_12 = arith.constant dense<0.000000e+00> : vector<8x4x32xf32>
    %26 = tpu.matmul %25, %0, %cst_12 {dimension_numbers = #tpu.dot_dimension_numbers<[2], [1], [1], [2], [0, 0, 0, 1, 1, 2], [0], [0]>} : vector<8x4x8xf32>, vector<8x8x32xf32>, vector<8x4x32xf32> -> vector<8x4x32xf32>
    "tpu.trace_stop"() : () -> ()
    %27 = vector.shape_cast %25 : vector<8x4x8xf32> to vector<32x8xf32>
    %c0_13 = arith.constant 0 : index
    %c0_14 = arith.constant 0 : index
    %28 = vector.load %arg6[%c0_13, %c0_14] : memref<32x8xf32, #tpu.memory_space<vmem>>, vector<32x8xf32>
    tpu.vector_store %arg6[%c0_13, %c0_14], %27 {strides = array<i32>} : memref<32x8xf32, #tpu.memory_space<vmem>>, vector<32x8xf32>,
    %29 = vector.shape_cast %26 : vector<8x4x32xf32> to vector<32x32xf32>
    %c0_15 = arith.constant 0 : index
    %c0_16 = arith.constant 0 : index
    %30 = vector.load %arg5[%c0_15, %c0_16] : memref<32x32xf32, #tpu.memory_space<vmem>>, vector<32x32xf32>
    tpu.vector_store %arg5[%c0_15, %c0_16], %29 {strides = array<i32>} : memref<32x32xf32, #tpu.memory_space<vmem>>, vector<32x32xf32>,
    return
  }
  func.func @transform_0(%arg0: i32) -> (i32, i32) {
    %c0_i32 = arith.constant 0 : i32
    %c0_i32_0 = arith.constant 0 : i32
    return %arg0, %c0_i32 : i32, i32
  }
  func.func @transform_1(%arg0: i32) -> (i32, i32, i32) {
    %c0_i32 = arith.constant 0 : i32
    %c0_i32_0 = arith.constant 0 : i32
    %c0_i32_1 = arith.constant 0 : i32
    return %arg0, %c0_i32, %c0_i32_0 : i32, i32, i32
  }
  func.func @transform_2(%arg0: i32) -> (i32, i32) {
    %c0_i32 = arith.constant 0 : i32
    %c0_i32_0 = arith.constant 0 : i32
    %c0_i32_1 = arith.constant 0 : i32
    return %c0_i32, %c0_i32_0 : i32, i32
  }
  func.func @transform_3(%arg0: i32) -> (i32, i32) {
    %c0_i32 = arith.constant 0 : i32
    %c0_i32_0 = arith.constant 0 : i32
    %c0_i32_1 = arith.constant 0 : i32
    return %c0_i32, %c0_i32_0 : i32, i32
  }
  func.func @transform_4(%arg0: i32) -> (i32, i32) {
    %c0_i32 = arith.constant 0 : i32
    %c0_i32_0 = arith.constant 0 : i32
    return %arg0, %c0_i32 : i32, i32
  }
  func.func @transform_5(%arg0: i32) -> (i32, i32) {
    %c0_i32 = arith.constant 0 : i32
    %c0_i32_0 = arith.constant 0 : i32
    return %arg0, %c0_i32 : i32, i32
  }
}

</mosaic_0001>

<llo_original>
// kernel: tpu_custom_call.1
$region0: #{tpu_custom_call.1}
  #allocation0 [shape = 'u32[]', space=smem, size = 0x4, offset = 0x4, fixed_abs, tag = 'smem constant byte address 0x4 - core index']
  #allocation1 [shape = 'u32[144,128]{1,0:T(1,128)}', space=vmem, size = 0x12000, scoped, tag = 'internal scratch']
  %s0 = inlined_call_operand.vmem [shape: s32[8,1], index: 0, kind: input, shape index: {}]
  %s1 = inlined_call_operand.hbm [shape: f32[8,8,32], index: 1, kind: input, shape index: {}]
  %s2 = inlined_call_operand.vmem [shape: f32[32,16], index: 2, kind: input, shape index: {}]
  %s3 = inlined_call_operand.vmem [shape: f32[4,16], index: 3, kind: input, shape index: {}]
  %s4 = inlined_call_operand.hbm [shape: f32[32,32], index: 4, kind: output, shape index: {0}]
  %s5 = inlined_call_operand.vmem [shape: f32[32,8], index: 5, kind: output, shape index: {1}]
  %6 = xla_tuple %s4, %s5
  %s7 = sld [smem:[#allocation0]]
  $region38: #{tpu_custom_call.1} parent=0
    _
  %s9 = ssub.s32 1, %s7
  %s10 = scalar_select 0, %s9, %s7
  $region1: #{tpu_custom_call.1} parent=0
    #allocation2 [shape = 'u8[32768]{0}', space=vmem, size = 0x8000, scoped, tag = 'input window, operand 1, single buffered']
    #allocation3 [shape = 's32[1]{0}', space=sflag, size = 0x4, scoped, tag = 'scoped memory for tpu_custom_call.1']
    #allocation4 [shape = 's32[1]{0}', space=sflag, size = 0x4, scoped, tag = 'scoped memory for tpu_custom_call.1']
    #allocation5 [shape = 'u8[16384]{0}', space=vmem, size = 0x4000, scoped, tag = 'output window, operand 0, single buffered']
    %11 = vsyncpa [#allocation3], 0
    %12 = vsyncpa [#allocation4], 0
    // Predicated region
    $region2: #{tpu_custom_call.1} parent=1 // pred_check
      _
    $region3: #{tpu_custom_call.1} parent=1 // pred_check_branch
      %14 = sbr.rel (0) target = $region5
    $region4: #{tpu_custom_call.1} parent=1 // pred_region
      _
    $region5: #{tpu_custom_call.1} parent=1 // pred_fallthru
      _
    // Predicated region
    $region6: #{tpu_custom_call.1} parent=1 // pred_check
      _
    $region7: #{tpu_custom_call.1} parent=1 // pred_check_branch
      %16 = sbr.rel (0) target = $region9
    $region8: #{tpu_custom_call.1} parent=1 // pred_region
      %s18 = ssub.s32 1024, 1024
      %19 = vsyncadd [#allocation3], %s18
      %s20 = sshll.u32 [#allocation2], 4
      %s21 = int_to_ptr.vmem [resolvable:$true] %s20
      %26 = dma.hbm_to_vmem [thread:$0]  %s1, 1024, %s21, [#allocation3], 128, 128, 8
    $region9: #{tpu_custom_call.1} parent=1 // pred_fallthru
      _
    // Predicated region
    $region10: #{tpu_custom_call.1} parent=1 // pred_check
      _
    $region11: #{tpu_custom_call.1} parent=1 // pred_check_branch
      %28 = sbr.rel (0) target = $region13
    $region12: #{tpu_custom_call.1} parent=1 // pred_region
      _
    $region13: #{tpu_custom_call.1} parent=1 // pred_fallthru
      _
    // Predicated region
    $region14: #{tpu_custom_call.1} parent=1 // pred_check
      _
    $region15: #{tpu_custom_call.1} parent=1 // pred_check_branch
      %30 = sbr.rel (0) target = $region17
    $region16: #{tpu_custom_call.1} parent=1 // pred_region
      _
    $region17: #{tpu_custom_call.1} parent=1 // pred_fallthru
      _
    // Predicated region
    $region18: #{tpu_custom_call.1} parent=1 // pred_check
      _
    $region19: #{tpu_custom_call.1} parent=1 // pred_check_branch
      %32 = sbr.rel (0) target = $region21
    $region20: #{tpu_custom_call.1} parent=1 // pred_region
      %33 = dma.done [#allocation3], 1024
    $region21: #{tpu_custom_call.1} parent=1 // pred_fallthru
      _
    %v34 = vld [vmem:[#allocation2] sm:$0xff]
    %v35 = vld [vmem:[#allocation2 + $0x8] sm:$0xff]
    %v36 = vld [vmem:[#allocation2 + $0x10] sm:$0xff]
    %v37 = vld [vmem:[#allocation2 + $0x18] sm:$0xff]
    %v38 = vld [vmem:[#allocation2 + $0x20] sm:$0xff]
    %v39 = vld [vmem:[#allocation2 + $0x28] sm:$0xff]
    %v40 = vld [vmem:[#allocation2 + $0x30] sm:$0xff]
    %v41 = vld [vmem:[#allocation2 + $0x38] sm:$0xff]
    %v42 = vld [vmem:[%s2] sm:$0xff]
    %v43 = vld [vmem:[%s2 + $0x8] sm:$0xff]
    %v44 = vld [vmem:[%s2 + $0x10] sm:$0xff]
    %v45 = vld [vmem:[%s2 + $0x18] sm:$0xff]
    %v46 = vld [vmem:[%s3] sm:$0xf]
    %v47 = vld [vmem:[%s0] sm:$0xff]
    %vm48 = vcmask 261120
    %v50 = vsel %vm48, %v34, 0
    %v53 = vsel %vm48, %v35, 0
    %v56 = vsel %vm48, %v36, 0
    %v59 = vsel %vm48, %v37, 0
    %v62 = vsel %vm48, %v38, 0
    %v65 = vsel %vm48, %v39, 0
    %v68 = vsel %vm48, %v40, 0
    %v71 = vsel %vm48, %v41, 0
    %73 = vmatprep.subr.mxu0 0.0
    %74 = vmatpush1.msra.mxu0 %v42
    %75 = vmatprep.subr.mxu0 0.0
    %76 = vmatpush1.msra.mxu0 %v43
    %77 = vmatprep.subr.mxu0 0.0
    %78 = vmatpush1.msra.mxu0 %v44
    %79 = vmatprep.subr.mxu0 0.0
    %80 = vmatpush1.msra.mxu0 %v45
    %81 = vmatprep.subr.mxu0 0.0
    %82 = vmatpush1.msra.mxu0 0.0
    %83 = vmatprep.subr.mxu0 0.0
    %84 = vmatpush1.msra.mxu0 0.0
    %85 = vmatprep.subr.mxu0 0.0
    %86 = vmatpush1.msra.mxu0 0.0
    %87 = vmatprep.subr.mxu0 0.0
    %88 = vmatpush1.msra.mxu0 0.0
    %89 = vmatprep.subr.mxu0 0.0
    %90 = vmatpush1.msra.mxu0 0.0
    %91 = vmatprep.subr.mxu0 0.0
    %92 = vmatpush1.msra.mxu0 0.0
    %93 = vmatprep.subr.mxu0 0.0
    %94 = vmatpush1.msra.mxu0 0.0
    %95 = vmatprep.subr.mxu0 0.0
    %96 = vmatpush1.msra.mxu0 0.0
    %97 = vmatprep.subr.mxu0 0.0
    %98 = vmatpush1.msra.mxu0 0.0
    %99 = vmatprep.subr.mxu0 0.0
    %100 = vmatpush1.msra.mxu0 0.0
    %101 = vmatprep.subr.mxu0 0.0
    %102 = vmatpush1.msra.mxu0 0.0
    %103 = vmatprep.subr.mxu0 0.0
    %104 = vmatpush1.msra.mxu0 0.0
    %105 = vmatprep.subr.mxu0 0.0
    %106 = vmatpush1.msra.mxu0 0.0
    %107 = vmatprep.subr.mxu0 0.0
    %108 = vmatpush1.msra.mxu0 0.0
    %109 = vmatprep.subr.mxu0 0.0
    %110 = vmatpush1.msra.mxu0 0.0
    %111 = vmatprep.subr.mxu0 0.0
    %112 = vmatpush1.msra.mxu0 0.0
    %113 = vmatprep.subr.mxu0 0.0
    %114 = vmatpush1.msra.mxu0 0.0
    %115 = vmatprep.subr.mxu0 0.0
    %116 = vmatpush1.msra.mxu0 0.0
    %117 = vmatprep.subr.mxu0 0.0
    %118 = vmatpush1.msra.mxu0 0.0
    %119 = vmatprep.subr.mxu0 0.0
    %120 = vmatpush1.msra.mxu0 0.0
    %121 = vmatprep.subr.mxu0 0.0
    %122 = vmatpush1.msra.mxu0 0.0
    %123 = vmatprep.subr.mxu0 0.0
    %124 = vmatpush1.msra.mxu0 0.0
    %125 = vmatprep.subr.mxu0 0.0
    %126 = vmatpush1.msra.mxu0 0.0
    %127 = vmatprep.subr.mxu0 0.0
    %128 = vmatpush1.msra.mxu0 0.0
    %129 = vmatprep.subr.mxu0 0.0
    %130 = vmatpush1.msra.mxu0 0.0
    %131 = vmatprep.subr.mxu0 0.0
    %132 = vmatpush1.msra.mxu0 0.0
    %133 = vmatprep.subr.mxu0 0.0
    %134 = vmatpush1.msra.mxu0 0.0
    %135 = vmatprep.subr.mxu0 0.0
    %136 = vmatpush1.msra.mxu0 0.0
    %137 = vmatprep.mubr.f32.mxu0 0.0
    %138 = vmatmul.mubr.f32.gmra.mrb[0].mxu0 %v50
    %v139 = vpop.f32.mrb[0].mxu0
    %v140 = vadd.f32 0.0, %v139
    %v141 = vpop.f32.mrb[0].mxu0
    %142 = vmatprep.mubr.f32.mxu0 0.0
    %143 = vmatmul.mubr.f32.gmra.mrb[0].mxu0 %v53
    %v144 = vpop.f32.mrb[0].mxu0
    %v145 = vadd.f32 0.0, %v144
    %v146 = vpop.f32.mrb[0].mxu0
    %147 = vmatprep.mubr.f32.mxu0 0.0
    %148 = vmatmul.mubr.f32.gmra.mrb[0].mxu0 %v56
    %v149 = vpop.f32.mrb[0].mxu0
    %v150 = vadd.f32 0.0, %v149
    %v151 = vpop.f32.mrb[0].mxu0
    %152 = vmatprep.mubr.f32.mxu0 0.0
    %153 = vmatmul.mubr.f32.gmra.mrb[0].mxu0 %v59
    %v154 = vpop.f32.mrb[0].mxu0
    %v155 = vadd.f32 0.0, %v154
    %v156 = vpop.f32.mrb[0].mxu0
    %157 = vmatprep.mubr.f32.mxu0 0.0
    %158 = vmatmul.mubr.f32.gmra.mrb[0].mxu0 %v62
    %v159 = vpop.f32.mrb[0].mxu0
    %v160 = vadd.f32 0.0, %v159
    %v161 = vpop.f32.mrb[0].mxu0
    %162 = vmatprep.mubr.f32.mxu0 0.0
    %163 = vmatmul.mubr.f32.gmra.mrb[0].mxu0 %v65
    %v164 = vpop.f32.mrb[0].mxu0
    %v165 = vadd.f32 0.0, %v164
    %v166 = vpop.f32.mrb[0].mxu0
    %167 = vmatprep.mubr.f32.mxu0 0.0
    %168 = vmatmul.mubr.f32.gmra.mrb[0].mxu0 %v68
    %v169 = vpop.f32.mrb[0].mxu0
    %v170 = vadd.f32 0.0, %v169
    %v171 = vpop.f32.mrb[0].mxu0
    %172 = vmatprep.mubr.f32.mxu0 0.0
    %173 = vmatmul.mubr.f32.gmra.mrb[0].mxu0 %v71
    %v174 = vpop.f32.mrb[0].mxu0
    %v175 = vadd.f32 0.0, %v174
    %v176 = vpop.f32.mrb[0].mxu0
    %177 = vdwg.mxu0
    %v178 = vtanh.pop %v140
    %v179 = vtanh.pop %v145
    %v180 = vtanh.pop %v150
    %v181 = vtanh.pop %v155
    %v182 = vtanh.pop %v160
    %v183 = vtanh.pop %v165
    %v184 = vtanh.pop %v170
    %v185 = vtanh.pop %v175
    %v186 = vcombine.low 0.0, 0.0
    %v187 = vcombine.high 0.0, 0.0
    %v189 = vunpack.c.l.s4 1983009808
    %v190 = vunpack.c.0.s8 %v189
    %v191 = vlaneseq
    %v192 = vshrl.u32 %v191, 7
    %v193 = vsub.s32 %v190, %v192
    %v194 = vrot.slane %v186, %v193
    %v196 = vunpack.c.l.s4 1983009808
    %v197 = vunpack.c.0.s8 %v196
    %v198 = vlaneseq
    %v199 = vshrl.u32 %v198, 7
    %v200 = vsub.s32 %v197, %v199
    %v201 = vrot.slane %v187, %v200
    %v202 = vcombine.low %v194, %v194
    %v203 = vcombine.high %v194, %v194
    %v205 = vunpack.c.l.s4 1934713408
    %v206 = vunpack.c.0.s8 %v205
    %v207 = vlaneseq
    %v208 = vshrl.u32 %v207, 7
    %v209 = vsub.s32 %v206, %v208
    %v210 = vrot.slane %v202, %v209
    %v212 = vunpack.c.l.s4 1934713408
    %v213 = vunpack.c.0.s8 %v212
    %v214 = vlaneseq
    %v215 = vshrl.u32 %v214, 7
    %v216 = vsub.s32 %v213, %v215
    %v217 = vrot.slane %v203, %v216
    %v218 = vcombine.low %v201, %v201
    %v219 = vcombine.high %v201, %v201
    %v221 = vunpack.c.l.s4 1934713408
    %v222 = vunpack.c.0.s8 %v221
    %v223 = vlaneseq
    %v224 = vshrl.u32 %v223, 7
    %v225 = vsub.s32 %v222, %v224
    %v226 = vrot.slane %v218, %v225
    %v228 = vunpack.c.l.s4 1934713408
    %v229 = vunpack.c.0.s8 %v228
    %v230 = vlaneseq
    %v231 = vshrl.u32 %v230, 7
    %v232 = vsub.s32 %v229, %v231
    %v233 = vrot.slane %v219, %v232
    %v234 = vcombine.high %v210, 0.0
    %v235 = vcombine.high %v217, 0.0
    %v236 = vcombine.high %v226, 0.0
    %v237 = vcombine.high %v233, 0.0
    %239 = vrot.lane.b32.xlu0 %v234, 8
    %v240 = vpop.permute.xlu0 %239
    %243 = vrot.lane.b32.xlu0 %v217, 16
    %v244 = vpop.permute.xlu0 %243
    %247 = vrot.lane.b32.xlu0 %v235, 24
    %v248 = vpop.permute.xlu0 %247
    %251 = vrot.lane.b32.xlu0 %v226, 32
    %v252 = vpop.permute.xlu0 %251
    %255 = vrot.lane.b32.xlu0 %v236, 40
    %v256 = vpop.permute.xlu0 %255
    %259 = vrot.lane.b32.xlu0 %v233, 48
    %v260 = vpop.permute.xlu0 %259
    %263 = vrot.lane.b32.xlu0 %v237, 56
    %v264 = vpop.permute.xlu0 %263
    %vm266 = vcmask 64512
    %v267 = vsel %vm266, %v210, %v240
    %vm268 = vcmask 130048
    %v269 = vsel %vm268, %v267, %v244
    %vm270 = vcmask 195584
    %v271 = vsel %vm270, %v269, %v248
    %v272 = vsel %vm48, %v271, %v252
    %vm273 = vcmask 326656
    %v274 = vsel %vm273, %v272, %v256
    %vm275 = vcmask 392192
    %v276 = vsel %vm275, %v274, %v260
    %vm277 = vcmask 457728
    %v278 = vsel %vm277, %v276, %v264
    %v280 = vsel %vm268, %v46, 0
    %v283 = vsel %vm268, %v178, 0
    %v286 = vsel %vm268, %v179, 0
    %v289 = vsel %vm268, %v180, 0
    %v292 = vsel %vm268, %v181, 0
    %v295 = vsel %vm268, %v182, 0
    %v298 = vsel %vm268, %v183, 0
    %v301 = vsel %vm268, %v184, 0
    %v304 = vsel %vm268, %v185, 0
    %306 = vmatprep.subr.mxu0 0.0
    %307 = vmatpush1.xpose.msra.mxu0 %v283
    %308 = vmatprep.subr.mxu0 0.0
    %309 = vmatpush1.xpose.msra.mxu0 %v286
    %310 = vmatprep.subr.mxu0 0.0
    %311 = vmatpush1.xpose.msra.mxu0 %v289
    %312 = vmatprep.subr.mxu0 0.0
    %313 = vmatpush1.xpose.msra.mxu0 %v292
    %314 = vmatprep.subr.mxu0 0.0
    %315 = vmatpush1.xpose.msra.mxu0 %v295
    %316 = vmatprep.subr.mxu0 0.0
    %317 = vmatpush1.xpose.msra.mxu0 %v298
    %318 = vmatprep.subr.mxu0 0.0
    %319 = vmatpush1.xpose.msra.mxu0 %v301
    %320 = vmatprep.subr.mxu0 0.0
    %321 = vmatpush1.xpose.msra.mxu0 %v304
    %322 = vmatprep.subr.mxu0 0.0
    %323 = vmatpush1.xpose.msra.mxu0 0.0
    %324 = vmatprep.subr.mxu0 0.0
    %325 = vmatpush1.xpose.msra.mxu0 0.0
    %326 = vmatprep.subr.mxu0 0.0
    %327 = vmatpush1.xpose.msra.mxu0 0.0
    %328 = vmatprep.subr.mxu0 0.0
    %329 = vmatpush1.xpose.msra.mxu0 0.0
    %330 = vmatprep.subr.mxu0 0.0
    %331 = vmatpush1.xpose.msra.mxu0 0.0
    %332 = vmatprep.subr.mxu0 0.0
    %333 = vmatpush1.xpose.msra.mxu0 0.0
    %334 = vmatprep.subr.mxu0 0.0
    %335 = vmatpush1.xpose.msra.mxu0 0.0
    %336 = vmatprep.subr.mxu0 0.0
    %337 = vmatpush1.xpose.msra.mxu0 0.0
    %338 = vmatprep.subr.mxu0 0.0
    %339 = vmatpush1.xpose.msra.mxu0 0.0
    %340 = vmatprep.subr.mxu0 0.0
    %341 = vmatpush1.xpose.msra.mxu0 0.0
    %342 = vmatprep.subr.mxu0 0.0
    %343 = vmatpush1.xpose.msra.mxu0 0.0
    %344 = vmatprep.subr.mxu0 0.0
    %345 = vmatpush1.xpose.msra.mxu0 0.0
    %346 = vmatprep.subr.mxu0 0.0
    %347 = vmatpush1.xpose.msra.mxu0 0.0
    %348 = vmatprep.subr.mxu0 0.0
    %349 = vmatpush1.xpose.msra.mxu0 0.0
    %350 = vmatprep.subr.mxu0 0.0
    %351 = vmatpush1.xpose.msra.mxu0 0.0
    %352 = vmatprep.subr.mxu0 0.0
    %353 = vmatpush1.xpose.msra.mxu0 0.0
    %354 = vmatprep.subr.mxu0 0.0
    %355 = vmatpush1.xpose.msra.mxu0 0.0
    %356 = vmatprep.subr.mxu0 0.0
    %357 = vmatpush1.xpose.msra.mxu0 0.0
    %358 = vmatprep.subr.mxu0 0.0
    %359 = vmatpush1.xpose.msra.mxu0 0.0
    %360 = vmatprep.subr.mxu0 0.0
    %361 = vmatpush1.xpose.msra.mxu0 0.0
    %362 = vmatprep.subr.mxu0 0.0
    %363 = vmatpush1.xpose.msra.mxu0 0.0
    %364 = vmatprep.subr.mxu0 0.0
    %365 = vmatpush1.xpose.msra.mxu0 0.0
    %366 = vmatprep.subr.mxu0 0.0
    %367 = vmatpush1.xpose.msra.mxu0 0.0
    %368 = vmatprep.subr.mxu0 0.0
    %369 = vmatpush1.xpose.msra.mxu0 0.0
    %370 = vmatprep.mubr.f32.mxu0 0.0
    %371 = vmatmul.mubr.f32.gmra.mrb[0].mxu0 %v280
    %v372 = vpop.f32.mrb[0].mxu0
    %v373 = vadd.f32 %v278, %v372
    %v374 = vpop.f32.mrb[0].mxu0
    %375 = vdwg.mxu0
    %377 = vrot.lane.b32.xlu0 %v373, 120
    %v378 = vpop.permute.xlu0 %377
    %380 = vrot.lane.b32.xlu0 %v373, 112
    %v381 = vpop.permute.xlu0 %380
    %383 = vrot.lane.b32.xlu0 %v373, 104
    %v384 = vpop.permute.xlu0 %383
    %386 = vrot.lane.b32.xlu0 %v373, 96
    %v387 = vpop.permute.xlu0 %386
    %389 = vrot.lane.b32.xlu0 %v373, 88
    %v390 = vpop.permute.xlu0 %389
    %392 = vrot.lane.b32.xlu0 %v373, 80
    %v393 = vpop.permute.xlu0 %392
    %395 = vrot.lane.b32.xlu0 %v373, 72
    %v396 = vpop.permute.xlu0 %395
    %v398 = vcombine.low %v373, %v381
    %v400 = vunpack.c.l.s4 1983009808
    %v401 = vunpack.c.0.s8 %v400
    %v402 = vlaneseq
    %v403 = vshrl.u32 %v402, 7
    %v404 = vsub.s32 %v401, %v403
    %v405 = vrot.slane %v398, %v404
    %v406 = vcombine.low %v378, %v384
    %v408 = vunpack.c.l.s4 1983009808
    %v409 = vunpack.c.0.s8 %v408
    %v410 = vlaneseq
    %v411 = vshrl.u32 %v410, 7
    %v412 = vsub.s32 %v409, %v411
    %v413 = vrot.slane %v406, %v412
    %v414 = vcombine.low %v387, %v393
    %v416 = vunpack.c.l.s4 1983009808
    %v417 = vunpack.c.0.s8 %v416
    %v418 = vlaneseq
    %v419 = vshrl.u32 %v418, 7
    %v420 = vsub.s32 %v417, %v419
    %v421 = vrot.slane %v414, %v420
    %v422 = vcombine.low %v390, %v396
    %v424 = vunpack.c.l.s4 1983009808
    %v425 = vunpack.c.0.s8 %v424
    %v426 = vlaneseq
    %v427 = vshrl.u32 %v426, 7
    %v428 = vsub.s32 %v425, %v427
    %v429 = vrot.slane %v422, %v428
    %v430 = vcombine.low %v405, %v413
    %v431 = vcombine.high %v405, %v413
    %v433 = vunpack.c.l.s4 1934713408
    %v434 = vunpack.c.0.s8 %v433
    %v435 = vlaneseq
    %v436 = vshrl.u32 %v435, 7
    %v437 = vsub.s32 %v434, %v436
    %v438 = vrot.slane %v430, %v437
    %v440 = vunpack.c.l.s4 1934713408
    %v441 = vunpack.c.0.s8 %v440
    %v442 = vlaneseq
    %v443 = vshrl.u32 %v442, 7
    %v444 = vsub.s32 %v441, %v443
    %v445 = vrot.slane %v431, %v444
    %v446 = vcombine.low %v421, %v429
    %v447 = vcombine.high %v421, %v429
    %v449 = vunpack.c.l.s4 1934713408
    %v450 = vunpack.c.0.s8 %v449
    %v451 = vlaneseq
    %v452 = vshrl.u32 %v451, 7
    %v453 = vsub.s32 %v450, %v452
    %v454 = vrot.slane %v446, %v453
    %v456 = vunpack.c.l.s4 1934713408
    %v457 = vunpack.c.0.s8 %v456
    %v458 = vlaneseq
    %v459 = vshrl.u32 %v458, 7
    %v460 = vsub.s32 %v457, %v459
    %v461 = vrot.slane %v447, %v460
    %v462 = vcombine.low %v438, %v454
    %v463 = vcombine.high %v438, %v454
    %v464 = vcombine.low %v445, %v461
    %v465 = vcombine.high %v445, %v461
    %v466 = vcombine.low %v462, %v464
    %v467 = vcombine.high %v462, %v464
    %v469 = vunpack.c.l.s4 1983009808
    %v470 = vunpack.c.0.s8 %v469
    %v471 = vlaneseq
    %v472 = vshrl.u32 %v471, 7
    %v473 = vsub.s32 %v470, %v472
    %v474 = vrot.slane %v466, %v473
    %v476 = vunpack.c.l.s4 1983009808
    %v477 = vunpack.c.0.s8 %v476
    %v478 = vlaneseq
    %v479 = vshrl.u32 %v478, 7
    %v480 = vsub.s32 %v477, %v479
    %v481 = vrot.slane %v467, %v480
    %v482 = vcombine.low %v463, %v465
    %v483 = vcombine.high %v463, %v465
    %v485 = vunpack.c.l.s4 1983009808
    %v486 = vunpack.c.0.s8 %v485
    %v487 = vlaneseq
    %v488 = vshrl.u32 %v487, 7
    %v489 = vsub.s32 %v486, %v488
    %v490 = vrot.slane %v482, %v489
    %v492 = vunpack.c.l.s4 1983009808
    %v493 = vunpack.c.0.s8 %v492
    %v494 = vlaneseq
    %v495 = vshrl.u32 %v494, 7
    %v496 = vsub.s32 %v493, %v495
    %v497 = vrot.slane %v483, %v496
    %v498 = vcombine.low %v474, %v490
    %v499 = vcombine.high %v474, %v490
    %v501 = vunpack.c.l.s4 1934713408
    %v502 = vunpack.c.0.s8 %v501
    %v503 = vlaneseq
    %v504 = vshrl.u32 %v503, 7
    %v505 = vsub.s32 %v502, %v504
    %v506 = vrot.slane %v498, %v505
    %v508 = vunpack.c.l.s4 1934713408
    %v509 = vunpack.c.0.s8 %v508
    %v510 = vlaneseq
    %v511 = vshrl.u32 %v510, 7
    %v512 = vsub.s32 %v509, %v511
    %v513 = vrot.slane %v499, %v512
    %v514 = vcombine.low %v481, %v497
    %v515 = vcombine.high %v481, %v497
    %v517 = vunpack.c.l.s4 1934713408
    %v518 = vunpack.c.0.s8 %v517
    %v519 = vlaneseq
    %v520 = vshrl.u32 %v519, 7
    %v521 = vsub.s32 %v518, %v520
    %v522 = vrot.slane %v514, %v521
    %v524 = vunpack.c.l.s4 1934713408
    %v525 = vunpack.c.0.s8 %v524
    %v526 = vlaneseq
    %v527 = vshrl.u32 %v526, 7
    %v528 = vsub.s32 %v525, %v527
    %v529 = vrot.slane %v515, %v528
    %v530 = vcombine.high %v506, 0.0
    %v531 = vcombine.high %v513, 0.0
    %v532 = vcombine.high %v522, 0.0
    %v533 = vcombine.high %v529, 0.0
    %v534 = vlaneseq
    %v535 = vand.u32 %v534, 127
    %v536 = vcombine.high %v47, %v47
    %v538 = vunpack.c.l.s4 1966171168
    %v539 = vunpack.c.0.s8 %v538
    %v540 = vlaneseq
    %v541 = vshrl.u32 %v540, 7
    %v542 = vsub.s32 %v539, %v541
    %v543 = vrot.slane %v47, %v542
    %v545 = vunpack.c.l.s4 1966171168
    %v546 = vunpack.c.0.s8 %v545
    %v547 = vlaneseq
    %v548 = vshrl.u32 %v547, 7
    %v549 = vsub.s32 %v546, %v548
    %v550 = vrot.slane %v536, %v549
    %v551 = vcombine.high %v543, %v543
    %v552 = vcombine.high %v550, %v550
    %v554 = vunpack.c.l.s4 1966171168
    %v555 = vunpack.c.0.s8 %v554
    %v556 = vlaneseq
    %v557 = vshrl.u32 %v556, 7
    %v558 = vsub.s32 %v555, %v557
    %v559 = vrot.slane %v543, %v558
    %v561 = vunpack.c.l.s4 1966171168
    %v562 = vunpack.c.0.s8 %v561
    %v563 = vlaneseq
    %v564 = vshrl.u32 %v563, 7
    %v565 = vsub.s32 %v562, %v564
    %v566 = vrot.slane %v550, %v565
    %v568 = vunpack.c.l.s4 1966171168
    %v569 = vunpack.c.0.s8 %v568
    %v570 = vlaneseq
    %v571 = vshrl.u32 %v570, 7
    %v572 = vsub.s32 %v569, %v571
    %v573 = vrot.slane %v551, %v572
    %v575 = vunpack.c.l.s4 1966171168
    %v576 = vunpack.c.0.s8 %v575
    %v577 = vlaneseq
    %v578 = vshrl.u32 %v577, 7
    %v579 = vsub.s32 %v576, %v578
    %v580 = vrot.slane %v552, %v579
    %v581 = vcombine.high %v559, %v559
    %v582 = vcombine.high %v566, %v566
    %v583 = vcombine.high %v573, %v573
    %v584 = vcombine.high %v580, %v580
    %v585 = vlaneseq
    %v586 = vshrl.u32 %v585, 7
    %v587 = vsub.s32 0, %v586
    %v588 = vrot.slane %v559, %v587
    %v589 = vlaneseq
    %v590 = vshrl.u32 %v589, 7
    %v591 = vsub.s32 0, %v590
    %v592 = vrot.slane %v573, %v591
    %v593 = vlaneseq
    %v594 = vshrl.u32 %v593, 7
    %v595 = vsub.s32 0, %v594
    %v596 = vrot.slane %v581, %v595
    %v597 = vlaneseq
    %v598 = vshrl.u32 %v597, 7
    %v599 = vsub.s32 0, %v598
    %v600 = vrot.slane %v583, %v599
    %v601 = vlaneseq
    %v602 = vshrl.u32 %v601, 7
    %v603 = vsub.s32 0, %v602
    %v604 = vrot.slane %v566, %v603
    %v605 = vlaneseq
    %v606 = vshrl.u32 %v605, 7
    %v607 = vsub.s32 0, %v606
    %v608 = vrot.slane %v580, %v607
    %v609 = vlaneseq
    %v610 = vshrl.u32 %v609, 7
    %v611 = vsub.s32 0, %v610
    %v612 = vrot.slane %v582, %v611
    %v613 = vlaneseq
    %v614 = vshrl.u32 %v613, 7
    %v615 = vsub.s32 0, %v614
    %v616 = vrot.slane %v584, %v615
    %617 = vset.pattern.permute.xlu0 0
    %618 = vperm.xlu0 %617, %v588
    %v619 = vpop.permute.xlu0 %618
    %620 = vset.pattern.permute.xlu0 0
    %621 = vperm.xlu0 %620, %v592
    %v622 = vpop.permute.xlu0 %621
    %623 = vset.pattern.permute.xlu0 0
    %624 = vperm.xlu0 %623, %v596
    %v625 = vpop.permute.xlu0 %624
    %626 = vset.pattern.permute.xlu0 0
    %627 = vperm.xlu0 %626, %v600
    %v628 = vpop.permute.xlu0 %627
    %629 = vset.pattern.permute.xlu0 0
    %630 = vperm.xlu0 %629, %v604
    %v631 = vpop.permute.xlu0 %630
    %632 = vset.pattern.permute.xlu0 0
    %633 = vperm.xlu0 %632, %v608
    %v634 = vpop.permute.xlu0 %633
    %635 = vset.pattern.permute.xlu0 0
    %636 = vperm.xlu0 %635, %v612
    %v637 = vpop.permute.xlu0 %636
    %638 = vset.pattern.permute.xlu0 0
    %639 = vperm.xlu0 %638, %v616
    %v640 = vpop.permute.xlu0 %639
    %vm641 = vcmp.ge.s32.totalorder %v535, %v619
    %vm642 = vcmp.ge.s32.totalorder %v535, %v622
    %vm643 = vcmp.ge.s32.totalorder %v535, %v625
    %vm644 = vcmp.ge.s32.totalorder %v535, %v628
    %vm645 = vcmp.ge.s32.totalorder %v535, %v631
    %vm646 = vcmp.ge.s32.totalorder %v535, %v634
    %vm647 = vcmp.ge.s32.totalorder %v535, %v637
    %vm648 = vcmp.ge.s32.totalorder %v535, %v640
    %v649 = vsub.f32 %v506, 10000.0
    %v650 = vsub.f32 %v530, 10000.0
    %v651 = vsub.f32 %v513, 10000.0
    %v652 = vsub.f32 %v531, 10000.0
    %v653 = vsub.f32 %v522, 10000.0
    %v654 = vsub.f32 %v532, 10000.0
    %v655 = vsub.f32 %v529, 10000.0
    %v656 = vsub.f32 %v533, 10000.0
    %v657 = vsel %vm641, %v649, %v506
    %v658 = vsel %vm642, %v650, %v530
    %v659 = vsel %vm643, %v651, %v513
    %v660 = vsel %vm644, %v652, %v531
    %v661 = vsel %vm645, %v653, %v522
    %v662 = vsel %vm646, %v654, %v532
    %v663 = vsel %vm647, %v655, %v529
    %v664 = vsel %vm648, %v656, %v533
    %vm665 = vcmask 60416
    %v666 = vsel %vm665, %v657, -inf
    %667 = vmax.xlane.f32.xlu0 %v666
    %v668 = vpop.xlane.xlu0 %667
    %v669 = vsel %vm665, %v658, -inf
    %670 = vmax.xlane.f32.xlu0 %v669
    %v671 = vpop.xlane.xlu0 %670
    %v672 = vsel %vm665, %v659, -inf
    %673 = vmax.xlane.f32.xlu0 %v672
    %v674 = vpop.xlane.xlu0 %673
    %v675 = vsel %vm665, %v660, -inf
    %676 = vmax.xlane.f32.xlu0 %v675
    %v677 = vpop.xlane.xlu0 %676
    %v678 = vsel %vm665, %v661, -inf
    %679 = vmax.xlane.f32.xlu0 %v678
    %v680 = vpop.xlane.xlu0 %679
    %v681 = vsel %vm665, %v662, -inf
    %682 = vmax.xlane.f32.xlu0 %v681
    %v683 = vpop.xlane.xlu0 %682
    %v684 = vsel %vm665, %v663, -inf
    %685 = vmax.xlane.f32.xlu0 %v684
    %v686 = vpop.xlane.xlu0 %685
    %v687 = vsel %vm665, %v664, -inf
    %688 = vmax.xlane.f32.xlu0 %v687
    %v689 = vpop.xlane.xlu0 %688
    %v690 = vsub.f32 %v657, %v668
    %v691 = vsub.f32 %v658, %v671
    %v692 = vsub.f32 %v659, %v674
    %v693 = vsub.f32 %v660, %v677
    %v694 = vsub.f32 %v661, %v680
    %v695 = vsub.f32 %v662, %v683
    %v696 = vsub.f32 %v663, %v686
    %v697 = vsub.f32 %v664, %v689
    %v698 = vmul.f32 %v690, 1.442695
    %v699 = vpow.pop %v698
    %v700 = vmul.f32 %v691, 1.442695
    %v701 = vpow.pop %v700
    %v702 = vmul.f32 %v692, 1.442695
    %v703 = vpow.pop %v702
    %v704 = vmul.f32 %v693, 1.442695
    %v705 = vpow.pop %v704
    %v706 = vmul.f32 %v694, 1.442695
    %v707 = vpow.pop %v706
    %v708 = vmul.f32 %v695, 1.442695
    %v709 = vpow.pop %v708
    %v710 = vmul.f32 %v696, 1.442695
    %v711 = vpow.pop %v710
    %v712 = vmul.f32 %v697, 1.442695
    %v713 = vpow.pop %v712
    %v714 = vsel %vm665, %v699, 0.0
    %715 = vadd.xlane.f32.xlu0 %v714
    %v716 = vpop.xlane.xlu0 %715
    %v717 = vsel %vm665, %v701, 0.0
    %718 = vadd.xlane.f32.xlu0 %v717
    %v719 = vpop.xlane.xlu0 %718
    %v720 = vsel %vm665, %v703, 0.0
    %721 = vadd.xlane.f32.xlu0 %v720
    %v722 = vpop.xlane.xlu0 %721
    %v723 = vsel %vm665, %v705, 0.0
    %724 = vadd.xlane.f32.xlu0 %v723
    %v725 = vpop.xlane.xlu0 %724
    %v726 = vsel %vm665, %v707, 0.0
    %727 = vadd.xlane.f32.xlu0 %v726
    %v728 = vpop.xlane.xlu0 %727
    %v729 = vsel %vm665, %v709, 0.0
    %730 = vadd.xlane.f32.xlu0 %v729
    %v731 = vpop.xlane.xlu0 %730
    %v732 = vsel %vm665, %v711, 0.0
    %733 = vadd.xlane.f32.xlu0 %v732
    %v734 = vpop.xlane.xlu0 %733
    %v735 = vsel %vm665, %v713, 0.0
    %736 = vadd.xlane.f32.xlu0 %v735
    %v737 = vpop.xlane.xlu0 %736
    %v738 = vrcp.pop %v716
    %v739 = vmul.f32 %v699, %v738
    %v740 = vrcp.pop %v719
    %v741 = vmul.f32 %v701, %v740
    %v742 = vrcp.pop %v722
    %v743 = vmul.f32 %v703, %v742
    %v744 = vrcp.pop %v725
    %v745 = vmul.f32 %v705, %v744
    %v746 = vrcp.pop %v728
    %v747 = vmul.f32 %v707, %v746
    %v748 = vrcp.pop %v731
    %v749 = vmul.f32 %v709, %v748
    %v750 = vrcp.pop %v734
    %v751 = vmul.f32 %v711, %v750
    %v752 = vrcp.pop %v737
    %v753 = vmul.f32 %v713, %v752
    %v755 = vsel %vm266, %v739, 0
    %757 = vmatprep.subr.mxu0 0.0
    %758 = vmatpush1.msra.mxu0 %v34
    %759 = vmatprep.subr.mxu0 0.0
    %760 = vmatpush1.msra.mxu0 0.0
    %761 = vmatprep.subr.mxu0 0.0
    %762 = vmatpush1.msra.mxu0 0.0
    %763 = vmatprep.subr.mxu0 0.0
    %764 = vmatpush1.msra.mxu0 0.0
    %765 = vmatprep.subr.mxu0 0.0
    %766 = vmatpush1.msra.mxu0 0.0
    %767 = vmatprep.subr.mxu0 0.0
    %768 = vmatpush1.msra.mxu0 0.0
    %769 = vmatprep.subr.mxu0 0.0
    %770 = vmatpush1.msra.mxu0 0.0
    %771 = vmatprep.subr.mxu0 0.0
    %772 = vmatpush1.msra.mxu0 0.0
    %773 = vmatprep.subr.mxu0 0.0
    %774 = vmatpush1.msra.mxu0 0.0
    %775 = vmatprep.subr.mxu0 0.0
    %776 = vmatpush1.msra.mxu0 0.0
    %777 = vmatprep.subr.mxu0 0.0
    %778 = vmatpush1.msra.mxu0 0.0
    %779 = vmatprep.subr.mxu0 0.0
    %780 = vmatpush1.msra.mxu0 0.0
    %781 = vmatprep.subr.mxu0 0.0
    %782 = vmatpush1.msra.mxu0 0.0
    %783 = vmatprep.subr.mxu0 0.0
    %784 = vmatpush1.msra.mxu0 0.0
    %785 = vmatprep.subr.mxu0 0.0
    %786 = vmatpush1.msra.mxu0 0.0
    %787 = vmatprep.subr.mxu0 0.0
    %788 = vmatpush1.msra.mxu0 0.0
    %789 = vmatprep.subr.mxu0 0.0
    %790 = vmatpush1.msra.mxu0 0.0
    %791 = vmatprep.subr.mxu0 0.0
    %792 = vmatpush1.msra.mxu0 0.0
    %793 = vmatprep.subr.mxu0 0.0
    %794 = vmatpush1.msra.mxu0 0.0
    %795 = vmatprep.subr.mxu0 0.0
    %796 = vmatpush1.msra.mxu0 0.0
    %797 = vmatprep.subr.mxu0 0.0
    %798 = vmatpush1.msra.mxu0 0.0
    %799 = vmatprep.subr.mxu0 0.0
    %800 = vmatpush1.msra.mxu0 0.0
    %801 = vmatprep.subr.mxu0 0.0
    %802 = vmatpush1.msra.mxu0 0.0
    %803 = vmatprep.subr.mxu0 0.0
    %804 = vmatpush1.msra.mxu0 0.0
    %805 = vmatprep.subr.mxu0 0.0
    %806 = vmatpush1.msra.mxu0 0.0
    %807 = vmatprep.subr.mxu0 0.0
    %808 = vmatpush1.msra.mxu0 0.0
    %809 = vmatprep.subr.mxu0 0.0
    %810 = vmatpush1.msra.mxu0 0.0
    %811 = vmatprep.subr.mxu0 0.0
    %812 = vmatpush1.msra.mxu0 0.0
    %813 = vmatprep.subr.mxu0 0.0
    %814 = vmatpush1.msra.mxu0 0.0
    %815 = vmatprep.subr.mxu0 0.0
    %816 = vmatpush1.msra.mxu0 0.0
    %817 = vmatprep.subr.mxu0 0.0
    %818 = vmatpush1.msra.mxu0 0.0
    %819 = vmatprep.subr.mxu0 0.0
    %820 = vmatpush1.msra.mxu0 0.0
    %821 = vmatprep.mubr.f32.mxu0 0.0
    %822 = vmatmul.mubr.f32.gmra.mrb[0].mxu0 %v755
    %v823 = vpop.f32.mrb[0].mxu0
    %v824 = vadd.f32 0.0, %v823
    %v825 = vpop.f32.mrb[0].mxu0
    %826 = vdwg.mxu0
    %v828 = vsel %vm266, %v741, 0
    %830 = vmatprep.subr.mxu0 0.0
    %831 = vmatpush1.msra.mxu0 %v35
    %832 = vmatprep.subr.mxu0 0.0
    %833 = vmatpush1.msra.mxu0 0.0
    %834 = vmatprep.subr.mxu0 0.0
    %835 = vmatpush1.msra.mxu0 0.0
    %836 = vmatprep.subr.mxu0 0.0
    %837 = vmatpush1.msra.mxu0 0.0
    %838 = vmatprep.subr.mxu0 0.0
    %839 = vmatpush1.msra.mxu0 0.0
    %840 = vmatprep.subr.mxu0 0.0
    %841 = vmatpush1.msra.mxu0 0.0
    %842 = vmatprep.subr.mxu0 0.0
    %843 = vmatpush1.msra.mxu0 0.0
    %844 = vmatprep.subr.mxu0 0.0
    %845 = vmatpush1.msra.mxu0 0.0
    %846 = vmatprep.subr.mxu0 0.0
    %847 = vmatpush1.msra.mxu0 0.0
    %848 = vmatprep.subr.mxu0 0.0
    %849 = vmatpush1.msra.mxu0 0.0
    %850 = vmatprep.subr.mxu0 0.0
    %851 = vmatpush1.msra.mxu0 0.0
    %852 = vmatprep.subr.mxu0 0.0
    %853 = vmatpush1.msra.mxu0 0.0
    %854 = vmatprep.subr.mxu0 0.0
    %855 = vmatpush1.msra.mxu0 0.0
    %856 = vmatprep.subr.mxu0 0.0
    %857 = vmatpush1.msra.mxu0 0.0
    %858 = vmatprep.subr.mxu0 0.0
    %859 = vmatpush1.msra.mxu0 0.0
    %860 = vmatprep.subr.mxu0 0.0
    %861 = vmatpush1.msra.mxu0 0.0
    %862 = vmatprep.subr.mxu0 0.0
    %863 = vmatpush1.msra.mxu0 0.0
    %864 = vmatprep.subr.mxu0 0.0
    %865 = vmatpush1.msra.mxu0 0.0
    %866 = vmatprep.subr.mxu0 0.0
    %867 = vmatpush1.msra.mxu0 0.0
    %868 = vmatprep.subr.mxu0 0.0
    %869 = vmatpush1.msra.mxu0 0.0
    %870 = vmatprep.subr.mxu0 0.0
    %871 = vmatpush1.msra.mxu0 0.0
    %872 = vmatprep.subr.mxu0 0.0
    %873 = vmatpush1.msra.mxu0 0.0
    %874 = vmatprep.subr.mxu0 0.0
    %875 = vmatpush1.msra.mxu0 0.0
    %876 = vmatprep.subr.mxu0 0.0
    %877 = vmatpush1.msra.mxu0 0.0
    %878 = vmatprep.subr.mxu0 0.0
    %879 = vmatpush1.msra.mxu0 0.0
    %880 = vmatprep.subr.mxu0 0.0
    %881 = vmatpush1.msra.mxu0 0.0
    %882 = vmatprep.subr.mxu0 0.0
    %883 = vmatpush1.msra.mxu0 0.0
    %884 = vmatprep.subr.mxu0 0.0
    %885 = vmatpush1.msra.mxu0 0.0
    %886 = vmatprep.subr.mxu0 0.0
    %887 = vmatpush1.msra.mxu0 0.0
    %888 = vmatprep.subr.mxu0 0.0
    %889 = vmatpush1.msra.mxu0 0.0
    %890 = vmatprep.subr.mxu0 0.0
    %891 = vmatpush1.msra.mxu0 0.0
    %892 = vmatprep.subr.mxu0 0.0
    %893 = vmatpush1.msra.mxu0 0.0
    %894 = vmatprep.mubr.f32.mxu0 0.0
    %895 = vmatmul.mubr.f32.gmra.mrb[0].mxu0 %v828
    %v896 = vpop.f32.mrb[0].mxu0
    %v897 = vadd.f32 0.0, %v896
    %v898 = vpop.f32.mrb[0].mxu0
    %899 = vdwg.mxu0
    %v901 = vsel %vm266, %v743, 0
    %903 = vmatprep.subr.mxu0 0.0
    %904 = vmatpush1.msra.mxu0 %v36
    %905 = vmatprep.subr.mxu0 0.0
    %906 = vmatpush1.msra.mxu0 0.0
    %907 = vmatprep.subr.mxu0 0.0
    %908 = vmatpush1.msra.mxu0 0.0
    %909 = vmatprep.subr.mxu0 0.0
    %910 = vmatpush1.msra.mxu0 0.0
    %911 = vmatprep.subr.mxu0 0.0
    %912 = vmatpush1.msra.mxu0 0.0
    %913 = vmatprep.subr.mxu0 0.0
    %914 = vmatpush1.msra.mxu0 0.0
    %915 = vmatprep.subr.mxu0 0.0
    %916 = vmatpush1.msra.mxu0 0.0
    %917 = vmatprep.subr.mxu0 0.0
    %918 = vmatpush1.msra.mxu0 0.0
    %919 = vmatprep.subr.mxu0 0.0
    %920 = vmatpush1.msra.mxu0 0.0
    %921 = vmatprep.subr.mxu0 0.0
    %922 = vmatpush1.msra.mxu0 0.0
    %923 = vmatprep.subr.mxu0 0.0
    %924 = vmatpush1.msra.mxu0 0.0
    %925 = vmatprep.subr.mxu0 0.0
    %926 = vmatpush1.msra.mxu0 0.0
    %927 = vmatprep.subr.mxu0 0.0
    %928 = vmatpush1.msra.mxu0 0.0
    %929 = vmatprep.subr.mxu0 0.0
    %930 = vmatpush1.msra.mxu0 0.0
    %931 = vmatprep.subr.mxu0 0.0
    %932 = vmatpush1.msra.mxu0 0.0
    %933 = vmatprep.subr.mxu0 0.0
    %934 = vmatpush1.msra.mxu0 0.0
    %935 = vmatprep.subr.mxu0 0.0
    %936 = vmatpush1.msra.mxu0 0.0
    %937 = vmatprep.subr.mxu0 0.0
    %938 = vmatpush1.msra.mxu0 0.0
    %939 = vmatprep.subr.mxu0 0.0
    %940 = vmatpush1.msra.mxu0 0.0
    %941 = vmatprep.subr.mxu0 0.0
    %942 = vmatpush1.msra.mxu0 0.0
    %943 = vmatprep.subr.mxu0 0.0
    %944 = vmatpush1.msra.mxu0 0.0
    %945 = vmatprep.subr.mxu0 0.0
    %946 = vmatpush1.msra.mxu0 0.0
    %947 = vmatprep.subr.mxu0 0.0
    %948 = vmatpush1.msra.mxu0 0.0
    %949 = vmatprep.subr.mxu0 0.0
    %950 = vmatpush1.msra.mxu0 0.0
    %951 = vmatprep.subr.mxu0 0.0
    %952 = vmatpush1.msra.mxu0 0.0
    %953 = vmatprep.subr.mxu0 0.0
    %954 = vmatpush1.msra.mxu0 0.0
    %955 = vmatprep.subr.mxu0 0.0
    %956 = vmatpush1.msra.mxu0 0.0
    %957 = vmatprep.subr.mxu0 0.0
    %958 = vmatpush1.msra.mxu0 0.0
    %959 = vmatprep.subr.mxu0 0.0
    %960 = vmatpush1.msra.mxu0 0.0
    %961 = vmatprep.subr.mxu0 0.0
    %962 = vmatpush1.msra.mxu0 0.0
    %963 = vmatprep.subr.mxu0 0.0
    %964 = vmatpush1.msra.mxu0 0.0
    %965 = vmatprep.subr.mxu0 0.0
    %966 = vmatpush1.msra.mxu0 0.0
    %967 = vmatprep.mubr.f32.mxu0 0.0
    %968 = vmatmul.mubr.f32.gmra.mrb[0].mxu0 %v901
    %v969 = vpop.f32.mrb[0].mxu0
    %v970 = vadd.f32 0.0, %v969
    %v971 = vpop.f32.mrb[0].mxu0
    %972 = vdwg.mxu0
    %v974 = vsel %vm266, %v745, 0
    %976 = vmatprep.subr.mxu0 0.0
    %977 = vmatpush1.msra.mxu0 %v37
    %978 = vmatprep.subr.mxu0 0.0
    %979 = vmatpush1.msra.mxu0 0.0
    %980 = vmatprep.subr.mxu0 0.0
    %981 = vmatpush1.msra.mxu0 0.0
    %982 = vmatprep.subr.mxu0 0.0
    %983 = vmatpush1.msra.mxu0 0.0
    %984 = vmatprep.subr.mxu0 0.0
    %985 = vmatpush1.msra.mxu0 0.0
    %986 = vmatprep.subr.mxu0 0.0
    %987 = vmatpush1.msra.mxu0 0.0
    %988 = vmatprep.subr.mxu0 0.0
    %989 = vmatpush1.msra.mxu0 0.0
    %990 = vmatprep.subr.mxu0 0.0
    %991 = vmatpush1.msra.mxu0 0.0
    %992 = vmatprep.subr.mxu0 0.0
    %993 = vmatpush1.msra.mxu0 0.0
    %994 = vmatprep.subr.mxu0 0.0
    %995 = vmatpush1.msra.mxu0 0.0
    %996 = vmatprep.subr.mxu0 0.0
    %997 = vmatpush1.msra.mxu0 0.0
    %998 = vmatprep.subr.mxu0 0.0
    %999 = vmatpush1.msra.mxu0 0.0
    %1000 = vmatprep.subr.mxu0 0.0
    %1001 = vmatpush1.msra.mxu0 0.0
    %1002 = vmatprep.subr.mxu0 0.0
    %1003 = vmatpush1.msra.mxu0 0.0
    %1004 = vmatprep.subr.mxu0 0.0
    %1005 = vmatpush1.msra.mxu0 0.0
    %1006 = vmatprep.subr.mxu0 0.0
    %1007 = vmatpush1.msra.mxu0 0.0
    %1008 = vmatprep.subr.mxu0 0.0
    %1009 = vmatpush1.msra.mxu0 0.0
    %1010 = vmatprep.subr.mxu0 0.0
    %1011 = vmatpush1.msra.mxu0 0.0
    %1012 = vmatprep.subr.mxu0 0.0
    %1013 = vmatpush1.msra.mxu0 0.0
    %1014 = vmatprep.subr.mxu0 0.0
    %1015 = vmatpush1.msra.mxu0 0.0
    %1016 = vmatprep.subr.mxu0 0.0
    %1017 = vmatpush1.msra.mxu0 0.0
    %1018 = vmatprep.subr.mxu0 0.0
    %1019 = vmatpush1.msra.mxu0 0.0
    %1020 = vmatprep.subr.mxu0 0.0
    %1021 = vmatpush1.msra.mxu0 0.0
    %1022 = vmatprep.subr.mxu0 0.0
    %1023 = vmatpush1.msra.mxu0 0.0
    %1024 = vmatprep.subr.mxu0 0.0
    %1025 = vmatpush1.msra.mxu0 0.0
    %1026 = vmatprep.subr.mxu0 0.0
    %1027 = vmatpush1.msra.mxu0 0.0
    %1028 = vmatprep.subr.mxu0 0.0
    %1029 = vmatpush1.msra.mxu0 0.0
    %1030 = vmatprep.subr.mxu0 0.0
    %1031 = vmatpush1.msra.mxu0 0.0
    %1032 = vmatprep.subr.mxu0 0.0
    %1033 = vmatpush1.msra.mxu0 0.0
    %1034 = vmatprep.subr.mxu0 0.0
    %1035 = vmatpush1.msra.mxu0 0.0
    %1036 = vmatprep.subr.mxu0 0.0
    %1037 = vmatpush1.msra.mxu0 0.0
    %1038 = vmatprep.subr.mxu0 0.0
    %1039 = vmatpush1.msra.mxu0 0.0
    %1040 = vmatprep.mubr.f32.mxu0 0.0
    %1041 = vmatmul.mubr.f32.gmra.mrb[0].mxu0 %v974
    %v1042 = vpop.f32.mrb[0].mxu0
    %v1043 = vadd.f32 0.0, %v1042
    %v1044 = vpop.f32.mrb[0].mxu0
    %1045 = vdwg.mxu0
    %v1047 = vsel %vm266, %v747, 0
    %1049 = vmatprep.subr.mxu0 0.0
    %1050 = vmatpush1.msra.mxu0 %v38
    %1051 = vmatprep.subr.mxu0 0.0
    %1052 = vmatpush1.msra.mxu0 0.0
    %1053 = vmatprep.subr.mxu0 0.0
    %1054 = vmatpush1.msra.mxu0 0.0
    %1055 = vmatprep.subr.mxu0 0.0
    %1056 = vmatpush1.msra.mxu0 0.0
    %1057 = vmatprep.subr.mxu0 0.0
    %1058 = vmatpush1.msra.mxu0 0.0
    %1059 = vmatprep.subr.mxu0 0.0
    %1060 = vmatpush1.msra.mxu0 0.0
    %1061 = vmatprep.subr.mxu0 0.0
    %1062 = vmatpush1.msra.mxu0 0.0
    %1063 = vmatprep.subr.mxu0 0.0
    %1064 = vmatpush1.msra.mxu0 0.0
    %1065 = vmatprep.subr.mxu0 0.0
    %1066 = vmatpush1.msra.mxu0 0.0
    %1067 = vmatprep.subr.mxu0 0.0
    %1068 = vmatpush1.msra.mxu0 0.0
    %1069 = vmatprep.subr.mxu0 0.0
    %1070 = vmatpush1.msra.mxu0 0.0
    %1071 = vmatprep.subr.mxu0 0.0
    %1072 = vmatpush1.msra.mxu0 0.0
    %1073 = vmatprep.subr.mxu0 0.0
    %1074 = vmatpush1.msra.mxu0 0.0
    %1075 = vmatprep.subr.mxu0 0.0
    %1076 = vmatpush1.msra.mxu0 0.0
    %1077 = vmatprep.subr.mxu0 0.0
    %1078 = vmatpush1.msra.mxu0 0.0
    %1079 = vmatprep.subr.mxu0 0.0
    %1080 = vmatpush1.msra.mxu0 0.0
    %1081 = vmatprep.subr.mxu0 0.0
    %1082 = vmatpush1.msra.mxu0 0.0
    %1083 = vmatprep.subr.mxu0 0.0
    %1084 = vmatpush1.msra.mxu0 0.0
    %1085 = vmatprep.subr.mxu0 0.0
    %1086 = vmatpush1.msra.mxu0 0.0
    %1087 = vmatprep.subr.mxu0 0.0
    %1088 = vmatpush1.msra.mxu0 0.0
    %1089 = vmatprep.subr.mxu0 0.0
    %1090 = vmatpush1.msra.mxu0 0.0
    %1091 = vmatprep.subr.mxu0 0.0
    %1092 = vmatpush1.msra.mxu0 0.0
    %1093 = vmatprep.subr.mxu0 0.0
    %1094 = vmatpush1.msra.mxu0 0.0
    %1095 = vmatprep.subr.mxu0 0.0
    %1096 = vmatpush1.msra.mxu0 0.0
    %1097 = vmatprep.subr.mxu0 0.0
    %1098 = vmatpush1.msra.mxu0 0.0
    %1099 = vmatprep.subr.mxu0 0.0
    %1100 = vmatpush1.msra.mxu0 0.0
    %1101 = vmatprep.subr.mxu0 0.0
    %1102 = vmatpush1.msra.mxu0 0.0
    %1103 = vmatprep.subr.mxu0 0.0
    %1104 = vmatpush1.msra.mxu0 0.0
    %1105 = vmatprep.subr.mxu0 0.0
    %1106 = vmatpush1.msra.mxu0 0.0
    %1107 = vmatprep.subr.mxu0 0.0
    %1108 = vmatpush1.msra.mxu0 0.0
    %1109 = vmatprep.subr.mxu0 0.0
    %1110 = vmatpush1.msra.mxu0 0.0
    %1111 = vmatprep.subr.mxu0 0.0
    %1112 = vmatpush1.msra.mxu0 0.0
    %1113 = vmatprep.mubr.f32.mxu0 0.0
    %1114 = vmatmul.mubr.f32.gmra.mrb[0].mxu0 %v1047
    %v1115 = vpop.f32.mrb[0].mxu0
    %v1116 = vadd.f32 0.0, %v1115
    %v1117 = vpop.f32.mrb[0].mxu0
    %1118 = vdwg.mxu0
    %v1120 = vsel %vm266, %v749, 0
    %1122 = vmatprep.subr.mxu0 0.0
    %1123 = vmatpush1.msra.mxu0 %v39
    %1124 = vmatprep.subr.mxu0 0.0
    %1125 = vmatpush1.msra.mxu0 0.0
    %1126 = vmatprep.subr.mxu0 0.0
    %1127 = vmatpush1.msra.mxu0 0.0
    %1128 = vmatprep.subr.mxu0 0.0
    %1129 = vmatpush1.msra.mxu0 0.0
    %1130 = vmatprep.subr.mxu0 0.0
    %1131 = vmatpush1.msra.mxu0 0.0
    %1132 = vmatprep.subr.mxu0 0.0
    %1133 = vmatpush1.msra.mxu0 0.0
    %1134 = vmatprep.subr.mxu0 0.0
    %1135 = vmatpush1.msra.mxu0 0.0
    %1136 = vmatprep.subr.mxu0 0.0
    %1137 = vmatpush1.msra.mxu0 0.0
    %1138 = vmatprep.subr.mxu0 0.0
    %1139 = vmatpush1.msra.mxu0 0.0
    %1140 = vmatprep.subr.mxu0 0.0
    %1141 = vmatpush1.msra.mxu0 0.0
    %1142 = vmatprep.subr.mxu0 0.0
    %1143 = vmatpush1.msra.mxu0 0.0
    %1144 = vmatprep.subr.mxu0 0.0
    %1145 = vmatpush1.msra.mxu0 0.0
    %1146 = vmatprep.subr.mxu0 0.0
    %1147 = vmatpush1.msra.mxu0 0.0
    %1148 = vmatprep.subr.mxu0 0.0
    %1149 = vmatpush1.msra.mxu0 0.0
    %1150 = vmatprep.subr.mxu0 0.0
    %1151 = vmatpush1.msra.mxu0 0.0
    %1152 = vmatprep.subr.mxu0 0.0
    %1153 = vmatpush1.msra.mxu0 0.0
    %1154 = vmatprep.subr.mxu0 0.0
    %1155 = vmatpush1.msra.mxu0 0.0
    %1156 = vmatprep.subr.mxu0 0.0
    %1157 = vmatpush1.msra.mxu0 0.0
    %1158 = vmatprep.subr.mxu0 0.0
    %1159 = vmatpush1.msra.mxu0 0.0
    %1160 = vmatprep.subr.mxu0 0.0
    %1161 = vmatpush1.msra.mxu0 0.0
    %1162 = vmatprep.subr.mxu0 0.0
    %1163 = vmatpush1.msra.mxu0 0.0
    %1164 = vmatprep.subr.mxu0 0.0
    %1165 = vmatpush1.msra.mxu0 0.0
    %1166 = vmatprep.subr.mxu0 0.0
    %1167 = vmatpush1.msra.mxu0 0.0
    %1168 = vmatprep.subr.mxu0 0.0
    %1169 = vmatpush1.msra.mxu0 0.0
    %1170 = vmatprep.subr.mxu0 0.0
    %1171 = vmatpush1.msra.mxu0 0.0
    %1172 = vmatprep.subr.mxu0 0.0
    %1173 = vmatpush1.msra.mxu0 0.0
    %1174 = vmatprep.subr.mxu0 0.0
    %1175 = vmatpush1.msra.mxu0 0.0
    %1176 = vmatprep.subr.mxu0 0.0
    %1177 = vmatpush1.msra.mxu0 0.0
    %1178 = vmatprep.subr.mxu0 0.0
    %1179 = vmatpush1.msra.mxu0 0.0
    %1180 = vmatprep.subr.mxu0 0.0
    %1181 = vmatpush1.msra.mxu0 0.0
    %1182 = vmatprep.subr.mxu0 0.0
    %1183 = vmatpush1.msra.mxu0 0.0
    %1184 = vmatprep.subr.mxu0 0.0
    %1185 = vmatpush1.msra.mxu0 0.0
    %1186 = vmatprep.mubr.f32.mxu0 0.0
    %1187 = vmatmul.mubr.f32.gmra.mrb[0].mxu0 %v1120
    %v1188 = vpop.f32.mrb[0].mxu0
    %v1189 = vadd.f32 0.0, %v1188
    %v1190 = vpop.f32.mrb[0].mxu0
    %1191 = vdwg.mxu0
    %v1193 = vsel %vm266, %v751, 0
    %1195 = vmatprep.subr.mxu0 0.0
    %1196 = vmatpush1.msra.mxu0 %v40
    %1197 = vmatprep.subr.mxu0 0.0
    %1198 = vmatpush1.msra.mxu0 0.0
    %1199 = vmatprep.subr.mxu0 0.0
    %1200 = vmatpush1.msra.mxu0 0.0
    %1201 = vmatprep.subr.mxu0 0.0
    %1202 = vmatpush1.msra.mxu0 0.0
    %1203 = vmatprep.subr.mxu0 0.0
    %1204 = vmatpush1.msra.mxu0 0.0
    %1205 = vmatprep.subr.mxu0 0.0
    %1206 = vmatpush1.msra.mxu0 0.0
    %1207 = vmatprep.subr.mxu0 0.0
    %1208 = vmatpush1.msra.mxu0 0.0
    %1209 = vmatprep.subr.mxu0 0.0
    %1210 = vmatpush1.msra.mxu0 0.0
    %1211 = vmatprep.subr.mxu0 0.0
    %1212 = vmatpush1.msra.mxu0 0.0
    %1213 = vmatprep.subr.mxu0 0.0
    %1214 = vmatpush1.msra.mxu0 0.0
    %1215 = vmatprep.subr.mxu0 0.0
    %1216 = vmatpush1.msra.mxu0 0.0
    %1217 = vmatprep.subr.mxu0 0.0
    %1218 = vmatpush1.msra.mxu0 0.0
    %1219 = vmatprep.subr.mxu0 0.0
    %1220 = vmatpush1.msra.mxu0 0.0
    %1221 = vmatprep.subr.mxu0 0.0
    %1222 = vmatpush1.msra.mxu0 0.0
    %1223 = vmatprep.subr.mxu0 0.0
    %1224 = vmatpush1.msra.mxu0 0.0
    %1225 = vmatprep.subr.mxu0 0.0
    %1226 = vmatpush1.msra.mxu0 0.0
    %1227 = vmatprep.subr.mxu0 0.0
    %1228 = vmatpush1.msra.mxu0 0.0
    %1229 = vmatprep.subr.mxu0 0.0
    %1230 = vmatpush1.msra.mxu0 0.0
    %1231 = vmatprep.subr.mxu0 0.0
    %1232 = vmatpush1.msra.mxu0 0.0
    %1233 = vmatprep.subr.mxu0 0.0
    %1234 = vmatpush1.msra.mxu0 0.0
    %1235 = vmatprep.subr.mxu0 0.0
    %1236 = vmatpush1.msra.mxu0 0.0
    %1237 = vmatprep.subr.mxu0 0.0
    %1238 = vmatpush1.msra.mxu0 0.0
    %1239 = vmatprep.subr.mxu0 0.0
    %1240 = vmatpush1.msra.mxu0 0.0
    %1241 = vmatprep.subr.mxu0 0.0
    %1242 = vmatpush1.msra.mxu0 0.0
    %1243 = vmatprep.subr.mxu0 0.0
    %1244 = vmatpush1.msra.mxu0 0.0
    %1245 = vmatprep.subr.mxu0 0.0
    %1246 = vmatpush1.msra.mxu0 0.0
    %1247 = vmatprep.subr.mxu0 0.0
    %1248 = vmatpush1.msra.mxu0 0.0
    %1249 = vmatprep.subr.mxu0 0.0
    %1250 = vmatpush1.msra.mxu0 0.0
    %1251 = vmatprep.subr.mxu0 0.0
    %1252 = vmatpush1.msra.mxu0 0.0
    %1253 = vmatprep.subr.mxu0 0.0
    %1254 = vmatpush1.msra.mxu0 0.0
    %1255 = vmatprep.subr.mxu0 0.0
    %1256 = vmatpush1.msra.mxu0 0.0
    %1257 = vmatprep.subr.mxu0 0.0
    %1258 = vmatpush1.msra.mxu0 0.0
    %1259 = vmatprep.mubr.f32.mxu0 0.0
    %1260 = vmatmul.mubr.f32.gmra.mrb[0].mxu0 %v1193
    %v1261 = vpop.f32.mrb[0].mxu0
    %v1262 = vadd.f32 0.0, %v1261
    %v1263 = vpop.f32.mrb[0].mxu0
    %1264 = vdwg.mxu0
    %v1266 = vsel %vm266, %v753, 0
    %1268 = vmatprep.subr.mxu0 0.0
    %1269 = vmatpush1.msra.mxu0 %v41
    %1270 = vmatprep.subr.mxu0 0.0
    %1271 = vmatpush1.msra.mxu0 0.0
    %1272 = vmatprep.subr.mxu0 0.0
    %1273 = vmatpush1.msra.mxu0 0.0
    %1274 = vmatprep.subr.mxu0 0.0
    %1275 = vmatpush1.msra.mxu0 0.0
    %1276 = vmatprep.subr.mxu0 0.0
    %1277 = vmatpush1.msra.mxu0 0.0
    %1278 = vmatprep.subr.mxu0 0.0
    %1279 = vmatpush1.msra.mxu0 0.0
    %1280 = vmatprep.subr.mxu0 0.0
    %1281 = vmatpush1.msra.mxu0 0.0
    %1282 = vmatprep.subr.mxu0 0.0
    %1283 = vmatpush1.msra.mxu0 0.0
    %1284 = vmatprep.subr.mxu0 0.0
    %1285 = vmatpush1.msra.mxu0 0.0
    %1286 = vmatprep.subr.mxu0 0.0
    %1287 = vmatpush1.msra.mxu0 0.0
    %1288 = vmatprep.subr.mxu0 0.0
    %1289 = vmatpush1.msra.mxu0 0.0
    %1290 = vmatprep.subr.mxu0 0.0
    %1291 = vmatpush1.msra.mxu0 0.0
    %1292 = vmatprep.subr.mxu0 0.0
    %1293 = vmatpush1.msra.mxu0 0.0
    %1294 = vmatprep.subr.mxu0 0.0
    %1295 = vmatpush1.msra.mxu0 0.0
    %1296 = vmatprep.subr.mxu0 0.0
    %1297 = vmatpush1.msra.mxu0 0.0
    %1298 = vmatprep.subr.mxu0 0.0
    %1299 = vmatpush1.msra.mxu0 0.0
    %1300 = vmatprep.subr.mxu0 0.0
    %1301 = vmatpush1.msra.mxu0 0.0
    %1302 = vmatprep.subr.mxu0 0.0
    %1303 = vmatpush1.msra.mxu0 0.0
    %1304 = vmatprep.subr.mxu0 0.0
    %1305 = vmatpush1.msra.mxu0 0.0
    %1306 = vmatprep.subr.mxu0 0.0
    %1307 = vmatpush1.msra.mxu0 0.0
    %1308 = vmatprep.subr.mxu0 0.0
    %1309 = vmatpush1.msra.mxu0 0.0
    %1310 = vmatprep.subr.mxu0 0.0
    %1311 = vmatpush1.msra.mxu0 0.0
    %1312 = vmatprep.subr.mxu0 0.0
    %1313 = vmatpush1.msra.mxu0 0.0
    %1314 = vmatprep.subr.mxu0 0.0
    %1315 = vmatpush1.msra.mxu0 0.0
    %1316 = vmatprep.subr.mxu0 0.0
    %1317 = vmatpush1.msra.mxu0 0.0
    %1318 = vmatprep.subr.mxu0 0.0
    %1319 = vmatpush1.msra.mxu0 0.0
    %1320 = vmatprep.subr.mxu0 0.0
    %1321 = vmatpush1.msra.mxu0 0.0
    %1322 = vmatprep.subr.mxu0 0.0
    %1323 = vmatpush1.msra.mxu0 0.0
    %1324 = vmatprep.subr.mxu0 0.0
    %1325 = vmatpush1.msra.mxu0 0.0
    %1326 = vmatprep.subr.mxu0 0.0
    %1327 = vmatpush1.msra.mxu0 0.0
    %1328 = vmatprep.subr.mxu0 0.0
    %1329 = vmatpush1.msra.mxu0 0.0
    %1330 = vmatprep.subr.mxu0 0.0
    %1331 = vmatpush1.msra.mxu0 0.0
    %1332 = vmatprep.mubr.f32.mxu0 0.0
    %1333 = vmatmul.mubr.f32.gmra.mrb[0].mxu0 %v1266
    %v1334 = vpop.f32.mrb[0].mxu0
    %v1335 = vadd.f32 0.0, %v1334
    %v1336 = vpop.f32.mrb[0].mxu0
    %1337 = vdwg.mxu0
    %v1338 = vcombine.low %v739, %v741
    %v1339 = vcombine.low %v743, %v745
    %v1340 = vcombine.low %v747, %v749
    %v1341 = vcombine.low %v751, %v753
    %1346 = vst.msk [vmem:[%s5] sm:$0xff] %vm266, %v1338
    %1347 = vst.msk [vmem:[%s5 + $0x8] sm:$0xff] %vm266, %v1339
    %1348 = vst.msk [vmem:[%s5 + $0x10] sm:$0xff] %vm266, %v1340
    %1349 = vst.msk [vmem:[%s5 + $0x18] sm:$0xff] %vm266, %v1341
    %v1358 = vcombine.low %v824, %v897
    %v1359 = vcombine.low %v970, %v1043
    %v1360 = vcombine.low %v1116, %v1189
    %v1361 = vcombine.low %v1262, %v1335
    %1366 = vst.msk [vmem:[#allocation5] sm:$0xff] %vm48, %v1358
    %1367 = vst.msk [vmem:[#allocation5 + $0x8] sm:$0xff] %vm48, %v1359
    %1368 = vst.msk [vmem:[#allocation5 + $0x10] sm:$0xff] %vm48, %v1360
    %1369 = vst.msk [vmem:[#allocation5 + $0x18] sm:$0xff] %vm48, %v1361
    // Predicated region
    $region22: #{tpu_custom_call.1} parent=1 // pred_check
      _
    $region23: #{tpu_custom_call.1} parent=1 // pred_check_branch
      %1371 = sbr.rel (0) target = $region25
    $region24: #{tpu_custom_call.1} parent=1 // pred_region
      %s1373 = ssub.s32 512, 512
      %1374 = vsyncadd [#allocation4], %s1373
      %s1375 = sshll.u32 [#allocation5], 4
      %s1376 = int_to_ptr.vmem [resolvable:$true] %s1375
      %1381 = dma.vmem_to_hbm [thread:$0]  %s1376, 512, %s4, [#allocation4], 128, 128, 8
    $region25: #{tpu_custom_call.1} parent=1 // pred_fallthru
      _
    // Predicated region
    $region26: #{tpu_custom_call.1} parent=1 // pred_check
      _
    $region27: #{tpu_custom_call.1} parent=1 // pred_check_branch
      %1383 = sbr.rel (0) target = $region29
    $region28: #{tpu_custom_call.1} parent=1 // pred_region
      _
    $region29: #{tpu_custom_call.1} parent=1 // pred_fallthru
      _
    // Predicated region
    $region30: #{tpu_custom_call.1} parent=1 // pred_check
      _
    $region31: #{tpu_custom_call.1} parent=1 // pred_check_branch
      %1385 = sbr.rel (0) target = $region33
    $region32: #{tpu_custom_call.1} parent=1 // pred_region
      %1386 = dma.done [#allocation4], 512
    $region33: #{tpu_custom_call.1} parent=1 // pred_fallthru
      _
    // Predicated region
    $region34: #{tpu_custom_call.1} parent=1 // pred_check
      _
    $region35: #{tpu_custom_call.1} parent=1 // pred_check_branch
      %1388 = sbr.rel (0) target = $region37
    $region36: #{tpu_custom_call.1} parent=1 // pred_region
      _
    $region37: #{tpu_custom_call.1} parent=1 // pred_fallthru
      _
    %1389 = vsyncpa [#allocation3], 1
    %1390 = vsyncpa [#allocation4], 1

</llo_original>
